<compile_context>
chip_gen: v5e
topology: v5e:2x2
jax: 0.10.0
libtpu: 0.0.40
codegen_flags: <defaults>
</compile_context>

<pallas_src>
import functools

import jax
import jax.numpy as jnp
from jax.experimental import pallas as pl
from jax.experimental.pallas import tpu as pltpu


# ---------------------------------------------------------------------------
# Hardware-aware sizing helpers
# ---------------------------------------------------------------------------
def _round_up(v, m):
    return (v + m - 1) // m * m


def _vmem_capacity_bytes():
    try:
        return int(pltpu.get_tpu_info().vmem_capacity_bytes)
    except Exception:
        return 64 << 20                      # conservative (v7x per-TC VMEM)


def _elementwise_dtype():
    """bf16 VPU/EUP path exists on v6e/v7x; keep f32 on v5e / unknown chips."""
    try:
        kind = jax.devices()[0].device_kind.lower()
    except Exception:
        return jnp.float32
    return jnp.bfloat16 if ("v6" in kind or "v7" in kind) else jnp.float32


def _choose_tile(n, vmem_cap):
    """Destination-row tile TM and padded node count, sized per generation."""
    if n <= 256:
        tm = _round_up(max(n, 1), 8)
        return tm, tm                        # single tile: lane dim == full dim
    n128 = _round_up(n, 128)
    # Cap tm * n_pad elements: ~1M on 64 MiB parts (v7x), ~4M on 128 MiB parts
    # (v5e / v6e) so the live elementwise temporaries + double-buffered adj +
    # resident h fit with headroom.
    max_elems = (1 << 20) if vmem_cap <= (64 << 20) else (4 << 20)
    tm = max(128, min(1024, (max_elems // n128) // 128 * 128))
    n_pad = _round_up(n, tm)
    # Megacore hygiene: keep >= 2 row tiles so both v7x TensorCores get work.
    while n_pad // tm < 2 and tm > 128:
        tm = max(128, (tm // 2) // 128 * 128)
        n_pad = _round_up(n, tm)
    return tm, n_pad


# ---------------------------------------------------------------------------
# Kernels
# ---------------------------------------------------------------------------
def _proj_kernel(x_ref, wext_ref, h_ref, adst_ref, asrcT_ref, *, heads, fout):
    """Fused linear transform + attention scores for one row tile of nodes.

    x_ref:     [TM, Fin]                (f32 layer 1 / bf16 layer 2)
    wext_ref:  [Fin, H*Fout + 2H] bf16  columns = [W | W @ att_stack]
    h_ref:     [H, TM, Fout]      bf16  transformed features, head-major
    adst_ref:  [TM, H]            f32   per-head <h_i, att_dst_h>
    asrcT_ref: [H, TM]            f32   per-head <h_j, att_src_h>, transposed
    """
    hfeat = heads * fout
    x16 = x_ref[...].astype(jnp.bfloat16)
    hs = jnp.dot(x16, wext_ref[...], preferred_element_type=jnp.float32)
    for hd in range(heads):                             # head-major store
        h_ref[hd] = hs[:, hd * fout:(hd + 1) * fout].astype(jnp.bfloat16)
    scores = hs[:, hfeat:]                              # [TM, 2H]
    adst_ref[...] = scores[:, :heads]
    asrcT_ref[...] = scores[:, heads:].T                # one small XLU transpose


def _attn_kernel(adj_ref, h_ref, asrcT_ref, adst_ref, *rest, heads, fout,
                 concat, apply_relu, e_dtype, neg_slope=0.2):
    """Softmax over incoming edges + aggregation for TM destination nodes.

    adj_ref:   [TM, N]       bf16  adj[i, j] = multiplicity of edge j -> i
    h_ref:     [H, N, Fout]  bf16  (grid-resident)
    asrcT_ref: [H, N]        f32   (grid-resident)
    adst_ref:  [TM, H]       f32
    bias_ref (concat only): [1, H*Fout] f32
    out_ref:   [TM, H*Fout]  head-concatenated (bf16 layer 1 / f32 layer 2)
    """
    if concat:
        bias_ref, out_ref = rest
        bias = bias_ref[...]
    else:
        (out_ref,) = rest

    adj = adj_ref[...]                        # bf16; never copied to f32
    a_dst32 = adst_ref[...]                   # [TM, H] f32
    a_src = asrcT_ref[...].astype(e_dtype)    # [H, N]
    a_dst = a_dst32.astype(e_dtype)           # [TM, H]

    # Analytic per-row upper bound on the edge score (LeakyReLU is monotone):
    #   m[i,h] = LeakyReLU(a_dst[i,h] + max_j a_src[h,j]) >= e[i,j,h]
    # This replaces the per-head masked row-max (XLU reduce over [TM,N]) and
    # the -1e30 mask add; non-edges are zeroed by the `* adj` multiply below.
    src_max = jnp.max(asrcT_ref[...], axis=1)                 # [H] f32
    bound = a_dst32 + src_max[None, :]
    bound = jnp.where(bound > 0.0, bound, neg_slope * bound).astype(e_dtype)

    outs = []
    for hd in range(heads):                   # heads is small (4): unrolled
        e = a_dst[:, hd:hd + 1] + a_src[hd:hd + 1, :]          # e[i,j]
        e = jnp.where(e > 0.0, e, neg_slope * e)               # LeakyReLU(0.2)
        p = jnp.exp(e - bound[:, hd:hd + 1]) * adj             # non-edges -> 0
        # f32 accumulation for the softmax denominator (p itself may be bf16).
        denom = jnp.sum(p.astype(jnp.float32), axis=-1, keepdims=True)
        # Padded rows have denom == 0 (sliced away by the wrapper); real rows
        # always have denom > 0 thanks to the forced self-loop.
        inv = pl.reciprocal(jnp.maximum(denom, 1e-20), approx=True)    # EUP
        # Normalize AFTER the aggregation matmul: scales [TM,Fout], not [TM,N].
        agg = jnp.dot(p.astype(jnp.bfloat16), h_ref[hd],
                      preferred_element_type=jnp.float32)      # [TM, Fout]
        o = agg * inv
        if concat:
            o = o + bias[:, hd * fout:(hd + 1) * fout]
            if apply_relu:
                o = jnp.maximum(o, 0.0)
        outs.append(o.astype(out_ref.dtype))
    # Single lane-dense [TM, H*Fout] store (H*Fout is a multiple of 128).
    out_ref[...] = jnp.concatenate(outs, axis=-1)


# ---------------------------------------------------------------------------
# Layer wrapper
# ---------------------------------------------------------------------------
def gat_conv(x_pad, adj_bf16, params, *, heads, fout, concat, apply_relu, tm,
             out_dtype, e_dtype, vmem_cap):
    """One GATConv layer on a padded dense adjacency (row-tiled grid)."""
    n_pad, fin = x_pad.shape
    hfeat = heads * fout
    grid = (n_pad // tm,)

    e_bytes = jnp.dtype(e_dtype).itemsize
    out_bytes = jnp.dtype(out_dtype).itemsize
    vmem_need = (2 * tm * n_pad * 2            # double-buffered bf16 adj tile
                 + n_pad * hfeat * 2           # grid-resident bf16 h
                 + n_pad * heads * 4           # grid-resident a_src_t
                 + 4 * tm * n_pad * e_bytes    # e / p temporaries
                 + tm * n_pad * 4              # f32 denom accumulation
                 + 2 * tm * hfeat * out_bytes  # double-buffered output tile
                 + 2 * tm * (fin + heads) * 4
                 + (2 << 20))                  # slack
    # Never request the full physical VMEM: leave >= 16 MiB headroom.
    vmem_limit = int(min(max(32 << 20, vmem_need), vmem_cap - (16 << 20)))
    cp = pltpu.CompilerParams(
        dimension_semantics=("parallel",),     # megacore sharding on v7x
        vmem_limit_bytes=vmem_limit)

    w_ext = params["w_ext"]
    ncols = w_ext.shape[1]                     # hfeat + 2*heads

    proj = pl.pallas_call(
        functools.partial(_proj_kernel, heads=heads, fout=fout),
        out_shape=(jax.ShapeDtypeStruct((heads, n_pad, fout), jnp.bfloat16),
                   jax.ShapeDtypeStruct((n_pad, heads), jnp.float32),
                   jax.ShapeDtypeStruct((heads, n_pad), jnp.float32)),
        grid=grid,
        in_specs=[pl.BlockSpec((tm, fin), lambda i: (i, 0)),
                  pl.BlockSpec((fin, ncols), lambda i: (0, 0))],
        out_specs=(pl.BlockSpec((heads, tm, fout), lambda i: (0, i, 0)),
                   pl.BlockSpec((tm, heads), lambda i: (i, 0)),
                   pl.BlockSpec((heads, tm), lambda i: (0, i))),
        compiler_params=cp,
        cost_estimate=pl.CostEstimate(
            flops=2 * n_pad * fin * ncols,
            transcendentals=0,
            bytes_accessed=(n_pad * fin * x_pad.dtype.itemsize + fin * ncols * 2
                            + n_pad * hfeat * 2 + 2 * n_pad * heads * 4)),
    )
    h, a_dst, a_src_t = proj(x_pad, w_ext)

    attn_inputs = [adj_bf16, h, a_src_t, a_dst]
    in_specs = [pl.BlockSpec((tm, n_pad), lambda i: (i, 0)),            # adj tile
                pl.BlockSpec((heads, n_pad, fout), lambda i: (0, 0, 0)),  # resident
                pl.BlockSpec((heads, n_pad), lambda i: (0, 0)),         # resident
                pl.BlockSpec((tm, heads), lambda i: (i, 0))]
    if concat:
        attn_inputs.append(params["bias"])
        in_specs.append(pl.BlockSpec((1, hfeat), lambda i: (0, 0)))

    attn = pl.pallas_call(
        functools.partial(_attn_kernel, heads=heads, fout=fout, concat=concat,
                          apply_relu=apply_relu, e_dtype=e_dtype),
        out_shape=jax.ShapeDtypeStruct((n_pad, hfeat), out_dtype),
        grid=grid,
        in_specs=in_specs,
        out_specs=pl.BlockSpec((tm, hfeat), lambda i: (i, 0)),
        compiler_params=cp,
        cost_estimate=pl.CostEstimate(
            flops=2 * heads * n_pad * n_pad * fout + 6 * heads * n_pad * n_pad,
            transcendentals=heads * n_pad * n_pad,
            bytes_accessed=(n_pad * n_pad * 2 + n_pad * hfeat * 2
                            + n_pad * hfeat * out_bytes + n_pad * heads * 8)),
    )
    # TODO(synk): for very large N the grid-resident h / adj rows should also
    # be blocked along the source dimension with an online-softmax accumulator.
    return attn(*attn_inputs)


# ---------------------------------------------------------------------------
# Full encoder forward
# ---------------------------------------------------------------------------
def gat_encoder_forward(x, edge_index, p1, p2, *, heads, hidden, latent):
    n = x.shape[0]
    vmem_cap = _vmem_capacity_bytes()
    e_dtype = _elementwise_dtype()
    tm, n_pad = _choose_tile(n, vmem_cap)

    # Dense padded bf16 adjacency built directly at n_pad (no f32 [N,N]
    # intermediate): adj[i, j] = #edges j -> i, diagonal forced to exactly 1
    # for real nodes (PyG remove_self_loops + add_self_loops).  Edge counts
    # <= 256 are exact in bf16.
    src, dst = edge_index[0], edge_index[1]
    adj = jnp.zeros((n_pad, n_pad), jnp.bfloat16)
    adj = adj.at[dst, src].add(jnp.ones(src.shape, jnp.bfloat16))
    diag = jnp.arange(n)
    adj = adj.at[diag, diag].set(jnp.bfloat16(1.0))

    x_pad = jnp.pad(x, ((0, n_pad - n), (0, 0)))

    # x = F.relu(gat_layer_1(x, edge_index))   (ReLU + bias fused in-kernel;
    # bf16 output halves the inter-layer HBM stream and feeds layer 2 directly)
    h1 = gat_conv(x_pad, adj, p1, heads=heads, fout=hidden, concat=True,
                  apply_relu=True, tm=tm, out_dtype=jnp.bfloat16,
                  e_dtype=e_dtype, vmem_cap=vmem_cap)
    # F.dropout(p=0.4) and GATConv attention dropout -> identity in eval mode.

    # x = gat_layer_2(x, edge_index)  (concat=False).  The kernel emits
    # lane-dense per-head results [N, H*latent] = [N, 128]; head-mean + bias
    # is a cheap trailing XLA op (avoids sub-128-lane masked stores).
    h2 = gat_conv(h1, adj, p2, heads=heads, fout=latent, concat=False,
                  apply_relu=False, tm=tm, out_dtype=jnp.float32,
                  e_dtype=e_dtype, vmem_cap=vmem_cap)
    out = h2.reshape(n_pad, heads, latent).mean(axis=1) + p2["bias"]
    # use_mlp=False -> no fc head.
    return out[:n]


# ---------------------------------------------------------------------------
# Parameter construction
# ---------------------------------------------------------------------------
def _glorot(key, shape):
    fan_in, fan_out = shape[0], shape[-1]
    s = jnp.sqrt(6.0 / (fan_in + fan_out))
    return jax.random.uniform(key, shape, jnp.float32, -s, s)


def make_gat_params(key, fin, fout, heads, *, concat):
    k1, k2, k3 = jax.random.split(key, 3)
    w = _glorot(k1, (fin, heads * fout))
    att_dst = _glorot(k2, (heads, fout))
    att_src = _glorot(k3, (heads, fout))
    # Block-diagonal att map [H*Fout, 2H] folded into W so the projection
    # kernel runs ONE matmul x @ [W | W @ att_stack] with K = Fin everywhere.
    att_stack = jnp.zeros((heads * fout, 2 * heads), jnp.float32)
    for hd in range(heads):
        att_stack = att_stack.at[hd * fout:(hd + 1) * fout, hd].set(att_dst[hd])
        att_stack = att_stack.at[hd * fout:(hd + 1) * fout, heads + hd].set(att_src[hd])
    w_ext = jnp.concatenate([w, w @ att_stack], axis=1).astype(jnp.bfloat16)
    bias_dim = heads * fout if concat else fout
    return dict(w_ext=w_ext, bias=jnp.zeros((1, bias_dim), jnp.float32))


if __name__ == "__main__":
    N, IN_CH, LATENT, HEADS, HIDDEN = 8, 16, 32, 4, 128
    E = 24

    key = jax.random.PRNGKey(0)
    kx, ke, kp1, kp2 = jax.random.split(key, 4)

    # Inputs: node features [N, IN_CH] and edge_index [2, E] (src row, dst row).
    x = jax.random.normal(kx, (N, IN_CH), jnp.float32)
    src = jax.random.randint(ke, (E,), 0, N)
    dst = jax.random.randint(jax.random.fold_in(ke, 1), (E,), 0, N)
    edge_index = jnp.stack([src, dst])

    # GATConv(in_channels=16, out=128, heads=4, concat=True)
    p1 = make_gat_params(kp1, IN_CH, HIDDEN, HEADS, concat=True)
    # GATConv(in_channels=512, out=latent_dim=32, heads=4, concat=False)
    p2 = make_gat_params(kp2, HEADS * HIDDEN, LATENT, HEADS, concat=False)

    out = gat_encoder_forward(x, edge_index, p1, p2,
                              heads=HEADS, hidden=HIDDEN, latent=LATENT)
    jax.block_until_ready(out)
    assert out.shape == (N, LATENT) and out.dtype == jnp.float32
    print("KERNEL_OK")
</pallas_src>

<mosaic_0001>
module attributes {stable_mosaic.version = 11 : i64} {
  func.func @_proj_kernel(%arg0: i32, %arg1: memref<8x16xf32, #tpu.memory_space<vmem>>, %arg2: memref<16x520xbf16, #tpu.memory_space<vmem>>, %arg3: memref<4x8x128xbf16, #tpu.memory_space<vmem>>, %arg4: memref<8x4xf32, #tpu.memory_space<vmem>>, %arg5: memref<4x8xf32, #tpu.memory_space<vmem>>) attributes {dimension_semantics = [#tpu.dimension_semantics<parallel>], iteration_bounds = array<i64: 1>, scalar_prefetch = 0 : i64, scratch_operands = 0 : i64, tpu.core_type = #tpu.core_type<tc>, window_params = [{transform_indices = @transform_0, window_bounds = array<i64: 8, 16>}, {pipeline_mode = #tpu.pipeline_mode<synchronous>, transform_indices = @transform_1, window_bounds = array<i64: 16, 520>}, {transform_indices = @transform_2, window_bounds = array<i64: 4, 8, 128>}, {transform_indices = @transform_3, window_bounds = array<i64: 8, 4>}, {transform_indices = @transform_4, window_bounds = array<i64: 4, 8>}]} {
    %c0 = arith.constant 0 : index
    %c0_0 = arith.constant 0 : index
    %0 = vector.load %arg1[%c0, %c0_0] : memref<8x16xf32, #tpu.memory_space<vmem>>, vector<8x16xf32>
    %1 = arith.truncf %0 : vector<8x16xf32> to vector<8x16xbf16>
    %c0_1 = arith.constant 0 : index
    %c0_2 = arith.constant 0 : index
    %2 = vector.load %arg2[%c0_1, %c0_2] : memref<16x520xbf16, #tpu.memory_space<vmem>>, vector<16x520xbf16>
    %cst = arith.constant dense<0.000000e+00> : vector<8x520xf32>
    %3 = tpu.matmul %1, %2, %cst {dimension_numbers = #tpu.dot_dimension_numbers<[1], [0], [0], [1], [0, 0, 1, 1], [], []>} : vector<8x16xbf16>, vector<16x520xbf16>, vector<8x520xf32> -> vector<8x520xf32>
    %4 = vector.extract_strided_slice %3 {offsets = [0, 0], sizes = [8, 128], strides = [1, 1]} : vector<8x520xf32> to vector<8x128xf32>
    %5 = arith.truncf %4 : vector<8x128xf32> to vector<8x128xbf16>
    %c0_3 = arith.constant 0 : index
    %c0_4 = arith.constant 0 : index
    %c0_5 = arith.constant 0 : index
    %6 = vector.load %arg3[%c0_3, %c0_4, %c0_5] : memref<4x8x128xbf16, #tpu.memory_space<vmem>>, vector<1x8x128xbf16>
    %7 = vector.shape_cast %6 : vector<1x8x128xbf16> to vector<8x128xbf16>
    %8 = vector.shape_cast %5 : vector<8x128xbf16> to vector<1x8x128xbf16>
    tpu.vector_store %arg3[%c0_3, %c0_4, %c0_5], %8 {strides = array<i32>} : memref<4x8x128xbf16, #tpu.memory_space<vmem>>, vector<1x8x128xbf16>,
    %9 = vector.extract_strided_slice %3 {offsets = [0, 128], sizes = [8, 128], strides = [1, 1]} : vector<8x520xf32> to vector<8x128xf32>
    %10 = arith.truncf %9 : vector<8x128xf32> to vector<8x128xbf16>
    %c1 = arith.constant 1 : index
    %c0_6 = arith.constant 0 : index
    %c0_7 = arith.constant 0 : index
    %11 = vector.load %arg3[%c1, %c0_6, %c0_7] : memref<4x8x128xbf16, #tpu.memory_space<vmem>>, vector<1x8x128xbf16>
    %12 = vector.shape_cast %11 : vector<1x8x128xbf16> to vector<8x128xbf16>
    %13 = vector.shape_cast %10 : vector<8x128xbf16> to vector<1x8x128xbf16>
    tpu.vector_store %arg3[%c1, %c0_6, %c0_7], %13 {strides = array<i32>} : memref<4x8x128xbf16, #tpu.memory_space<vmem>>, vector<1x8x128xbf16>,
    %14 = vector.extract_strided_slice %3 {offsets = [0, 256], sizes = [8, 128], strides = [1, 1]} : vector<8x520xf32> to vector<8x128xf32>
    %15 = arith.truncf %14 : vector<8x128xf32> to vector<8x128xbf16>
    %c2 = arith.constant 2 : index
    %c0_8 = arith.constant 0 : index
    %c0_9 = arith.constant 0 : index
    %16 = vector.load %arg3[%c2, %c0_8, %c0_9] : memref<4x8x128xbf16, #tpu.memory_space<vmem>>, vector<1x8x128xbf16>
    %17 = vector.shape_cast %16 : vector<1x8x128xbf16> to vector<8x128xbf16>
    %18 = vector.shape_cast %15 : vector<8x128xbf16> to vector<1x8x128xbf16>
    tpu.vector_store %arg3[%c2, %c0_8, %c0_9], %18 {strides = array<i32>} : memref<4x8x128xbf16, #tpu.memory_space<vmem>>, vector<1x8x128xbf16>,
    %19 = vector.extract_strided_slice %3 {offsets = [0, 384], sizes = [8, 128], strides = [1, 1]} : vector<8x520xf32> to vector<8x128xf32>
    %20 = arith.truncf %19 : vector<8x128xf32> to vector<8x128xbf16>
    %c3 = arith.constant 3 : index
    %c0_10 = arith.constant 0 : index
    %c0_11 = arith.constant 0 : index
    %21 = vector.load %arg3[%c3, %c0_10, %c0_11] : memref<4x8x128xbf16, #tpu.memory_space<vmem>>, vector<1x8x128xbf16>
    %22 = vector.shape_cast %21 : vector<1x8x128xbf16> to vector<8x128xbf16>
    %23 = vector.shape_cast %20 : vector<8x128xbf16> to vector<1x8x128xbf16>
    tpu.vector_store %arg3[%c3, %c0_10, %c0_11], %23 {strides = array<i32>} : memref<4x8x128xbf16, #tpu.memory_space<vmem>>, vector<1x8x128xbf16>,
    %24 = vector.extract_strided_slice %3 {offsets = [0, 512], sizes = [8, 8], strides = [1, 1]} : vector<8x520xf32> to vector<8x8xf32>
    %25 = vector.extract_strided_slice %24 {offsets = [0, 0], sizes = [8, 4], strides = [1, 1]} : vector<8x8xf32> to vector<8x4xf32>
    %c0_12 = arith.constant 0 : index
    %c0_13 = arith.constant 0 : index
    %26 = vector.load %arg4[%c0_12, %c0_13] : memref<8x4xf32, #tpu.memory_space<vmem>>, vector<8x4xf32>
    tpu.vector_store %arg4[%c0_12, %c0_13], %25 {strides = array<i32>} : memref<8x4xf32, #tpu.memory_space<vmem>>, vector<8x4xf32>,
    %27 = vector.extract_strided_slice %24 {offsets = [0, 4], sizes = [8, 4], strides = [1, 1]} : vector<8x8xf32> to vector<8x4xf32>
    %28 = tpu.transpose %27, [1, 0] : vector<8x4xf32> -> vector<4x8xf32>
    %c0_14 = arith.constant 0 : index
    %c0_15 = arith.constant 0 : index
    %29 = vector.load %arg5[%c0_14, %c0_15] : memref<4x8xf32, #tpu.memory_space<vmem>>, vector<4x8xf32>
    tpu.vector_store %arg5[%c0_14, %c0_15], %28 {strides = array<i32>} : memref<4x8xf32, #tpu.memory_space<vmem>>, vector<4x8xf32>,
    return
  }
  func.func @transform_0(%arg0: i32) -> (i32, i32) {
    %c0_i32 = arith.constant 0 : i32
    %c0_i32_0 = arith.constant 0 : i32
    return %arg0, %c0_i32 : i32, i32
  }
  func.func @transform_1(%arg0: i32) -> (i32, i32) {
    %c0_i32 = arith.constant 0 : i32
    %c0_i32_0 = arith.constant 0 : i32
    %c0_i32_1 = arith.constant 0 : i32
    return %c0_i32, %c0_i32_0 : i32, i32
  }
  func.func @transform_2(%arg0: i32) -> (i32, i32, i32) {
    %c0_i32 = arith.constant 0 : i32
    %c0_i32_0 = arith.constant 0 : i32
    %c0_i32_1 = arith.constant 0 : i32
    return %c0_i32, %arg0, %c0_i32_0 : i32, i32, i32
  }
  func.func @transform_3(%arg0: i32) -> (i32, i32) {
    %c0_i32 = arith.constant 0 : i32
    %c0_i32_0 = arith.constant 0 : i32
    return %arg0, %c0_i32 : i32, i32
  }
  func.func @transform_4(%arg0: i32) -> (i32, i32) {
    %c0_i32 = arith.constant 0 : i32
    %c0_i32_0 = arith.constant 0 : i32
    return %c0_i32, %arg0 : i32, i32
  }
}

</mosaic_0001>

<llo_original>
// kernel: tpu_custom_call.1
$region0: #{tpu_custom_call.1}
  #allocation0 [shape = 'u32[]', space=smem, size = 0x4, offset = 0x4, fixed_abs, tag = 'smem constant byte address 0x4 - core index']
  #allocation1 [shape = 'u32[72,128]{1,0:T(1,128)}', space=vmem, size = 0x9000, scoped, tag = 'internal scratch']
  %s0 = inlined_call_operand.hbm [shape: f32[8,16], index: 0, kind: input, shape index: {}]
  %s1 = inlined_call_operand.hbm [shape: bf16[16,520], index: 1, kind: input, shape index: {}]
  %s2 = inlined_call_operand.hbm [shape: bf16[4,8,128], index: 2, kind: output, shape index: {0}]
  %s3 = inlined_call_operand.vmem [shape: f32[8,4], index: 3, kind: output, shape index: {1}]
  %s4 = inlined_call_operand.hbm [shape: f32[4,8], index: 4, kind: output, shape index: {2}]
  %5 = xla_tuple %s2, %s3, %s4
  %s6 = sld [smem:[#allocation0]]
  $region42: #{tpu_custom_call.1} parent=0
    _
  %s8 = ssub.s32 1, %s6
  %s9 = scalar_select 0, %s8, %s6
  $region1: #{tpu_custom_call.1} parent=0
    #allocation2 [shape = 'u8[4096]{0}', space=vmem, size = 0x1000, scoped, tag = 'input window, operand 0, single buffered']
    #allocation3 [shape = 's32[1]{0}', space=sflag, size = 0x4, scoped, tag = 'scoped memory for tpu_custom_call.1']
    #allocation4 [shape = 's32[1]{0}', space=sflag, size = 0x4, scoped, tag = 'scoped memory for tpu_custom_call.1']
    #allocation5 [shape = 'u8[20480]{0}', space=vmem, size = 0x5000, scoped, tag = 'input window, operand 1, single buffered']
    #allocation6 [shape = 's32[1]{0}', space=sflag, size = 0x4, scoped, tag = 'scoped memory for tpu_custom_call.1']
    #allocation7 [shape = 'u8[8192]{0}', space=vmem, size = 0x2000, scoped, tag = 'output window, operand 0, single buffered']
    #allocation8 [shape = 'u8[2048]{0}', space=vmem, size = 0x800, scoped, tag = 'output window, operand 2, single buffered']
    #allocation9 [shape = 's32[1]{0}', space=sflag, size = 0x4, scoped, tag = 'scoped memory for tpu_custom_call.1']
    %10 = vsyncpa [#allocation3], 0
    %11 = vsyncpa [#allocation6], 0
    %12 = vsyncpa [#allocation4], 0
    %13 = vsyncpa [#allocation9], 0
    // Predicated region
    $region2: #{tpu_custom_call.1} parent=1 // pred_check
      _
    $region3: #{tpu_custom_call.1} parent=1 // pred_check_branch
      %15 = sbr.rel (0) target = $region5
    $region4: #{tpu_custom_call.1} parent=1 // pred_region
      %17 = vsyncadd [#allocation3], 0
      %s19 = sshll.u32 %s0, 4
      %s20 = int_to_ptr.hbm [resolvable:$true] %s19
      %s21 = sshll.u32 [#allocation2], 4
      %s22 = int_to_ptr.vmem [resolvable:$true] %s21
      %24 = dma.hbm_to_vmem [thread:$0]  %s20, 128, %s22, [#allocation3]
    $region5: #{tpu_custom_call.1} parent=1 // pred_fallthru
      _
    // Predicated region
    $region6: #{tpu_custom_call.1} parent=1 // pred_check
      _
    $region7: #{tpu_custom_call.1} parent=1 // pred_check_branch
      %26 = sbr.rel (0) target = $region9
    $region8: #{tpu_custom_call.1} parent=1 // pred_region
      %28 = vsyncadd [#allocation6], 0
      %s29 = sshll.u32 %s1, 4
      %s30 = int_to_ptr.hbm [resolvable:$true] %s29
      %s31 = sshll.u32 [#allocation5], 4
      %s32 = int_to_ptr.vmem [resolvable:$true] %s31
      %37 = dma.hbm_to_vmem [thread:$0]  %s30, 640, %s32, [#allocation6], 320, 320, 20
    $region9: #{tpu_custom_call.1} parent=1 // pred_fallthru
      _
    // Predicated region
    $region10: #{tpu_custom_call.1} parent=1 // pred_check
      _
    $region11: #{tpu_custom_call.1} parent=1 // pred_check_branch
      %39 = sbr.rel (0) target = $region13
    $region12: #{tpu_custom_call.1} parent=1 // pred_region
      %41 = dma.done [#allocation3], 128
    $region13: #{tpu_custom_call.1} parent=1 // pred_fallthru
      _
    // Predicated region
    $region14: #{tpu_custom_call.1} parent=1 // pred_check
      _
    $region15: #{tpu_custom_call.1} parent=1 // pred_check_branch
      %43 = sbr.rel (0) target = $region17
    $region16: #{tpu_custom_call.1} parent=1 // pred_region
      %45 = dma.done [#allocation6], 640
    $region17: #{tpu_custom_call.1} parent=1 // pred_fallthru
      _
    %v47 = vld [vmem:[#allocation2] sm:$0xff]
    %v48 = vpack.c.bf16 %v47, %v47
    %v49 = vld [vmem:[#allocation5] sm:$0xff]
    %v50 = vld [vmem:[#allocation5 + $0x8] sm:$0xff]
    %v51 = vld [vmem:[#allocation5 + $0x10] sm:$0xf]
    %v52 = vld [vmem:[#allocation5 + $0x14] sm:$0xff]
    %v53 = vld [vmem:[#allocation5 + $0x1c] sm:$0xff]
    %v54 = vld [vmem:[#allocation5 + $0x24] sm:$0xf]
    %v61 = vunpack.c.l.b16 %v49
    %v62 = vunpack.c.h.b16 %v49
    %v63 = vunpack.c.l.b16 %v50
    %v64 = vunpack.c.h.b16 %v50
    %v65 = vunpack.c.l.b16 %v51
    %v66 = vunpack.c.l.b16 %v52
    %v67 = vunpack.c.h.b16 %v52
    %v68 = vunpack.c.l.b16 %v53
    %v69 = vunpack.c.h.b16 %v53
    %v70 = vunpack.c.l.b16 %v54
    %v71 = vpack.c.b16 %v66, %v61
    %v72 = vpack.c.b16 %v67, %v62
    %v73 = vpack.c.b16 %v68, %v63
    %v74 = vpack.c.b16 %v69, %v64
    %v75 = vpack.c.b16 %v70, %v65
    %vm81 = vcmask 130048
    %v83 = vsel %vm81, %v48, 0
    %85 = vmatpush.bf16.msra.mxu0 0
    %86 = vmatpush.bf16.msra.mxu0 0
    %87 = vmatpush.bf16.msra.mxu0 0
    %88 = vmatpush.bf16.msra.mxu0 0
    %89 = vmatpush.bf16.msra.mxu0 0
    %90 = vmatpush.bf16.msra.mxu0 0
    %91 = vmatpush.bf16.msra.mxu0 0
    %92 = vmatpush.bf16.msra.mxu0 %v71
    %93 = vmatmul.bf16.gmra.mxu0 %v83
    %v94 = vpop.f32.mrf.mxu0
    %v95 = vadd.f32 0.0, %v94
    %v96 = vpop.f32.mrf.mxu0
    %97 = vdwg.mxu0
    %98 = vmatpush.bf16.msra.mxu0 0
    %99 = vmatpush.bf16.msra.mxu0 0
    %100 = vmatpush.bf16.msra.mxu0 0
    %101 = vmatpush.bf16.msra.mxu0 0
    %102 = vmatpush.bf16.msra.mxu0 0
    %103 = vmatpush.bf16.msra.mxu0 0
    %104 = vmatpush.bf16.msra.mxu0 0
    %105 = vmatpush.bf16.msra.mxu0 %v72
    %106 = vmatmul.bf16.gmra.mxu0 %v83
    %v107 = vpop.f32.mrf.mxu0
    %v108 = vadd.f32 0.0, %v107
    %v109 = vpop.f32.mrf.mxu0
    %110 = vdwg.mxu0
    %111 = vmatpush.bf16.msra.mxu0 0
    %112 = vmatpush.bf16.msra.mxu0 0
    %113 = vmatpush.bf16.msra.mxu0 0
    %114 = vmatpush.bf16.msra.mxu0 0
    %115 = vmatpush.bf16.msra.mxu0 0
    %116 = vmatpush.bf16.msra.mxu0 0
    %117 = vmatpush.bf16.msra.mxu0 0
    %118 = vmatpush.bf16.msra.mxu0 %v73
    %119 = vmatmul.bf16.gmra.mxu0 %v83
    %v120 = vpop.f32.mrf.mxu0
    %v121 = vadd.f32 0.0, %v120
    %v122 = vpop.f32.mrf.mxu0
    %123 = vdwg.mxu0
    %124 = vmatpush.bf16.msra.mxu0 0
    %125 = vmatpush.bf16.msra.mxu0 0
    %126 = vmatpush.bf16.msra.mxu0 0
    %127 = vmatpush.bf16.msra.mxu0 0
    %128 = vmatpush.bf16.msra.mxu0 0
    %129 = vmatpush.bf16.msra.mxu0 0
    %130 = vmatpush.bf16.msra.mxu0 0
    %131 = vmatpush.bf16.msra.mxu0 %v74
    %132 = vmatmul.bf16.gmra.mxu0 %v83
    %v133 = vpop.f32.mrf.mxu0
    %v134 = vadd.f32 0.0, %v133
    %v135 = vpop.f32.mrf.mxu0
    %136 = vdwg.mxu0
    %137 = vmatpush.bf16.msra.mxu0 0
    %138 = vmatpush.bf16.msra.mxu0 0
    %139 = vmatpush.bf16.msra.mxu0 0
    %140 = vmatpush.bf16.msra.mxu0 0
    %141 = vmatpush.bf16.msra.mxu0 0
    %142 = vmatpush.bf16.msra.mxu0 0
    %143 = vmatpush.bf16.msra.mxu0 0
    %144 = vmatpush.bf16.msra.mxu0 %v75
    %145 = vmatmul.bf16.gmra.mxu0 %v83
    %v146 = vpop.f32.mrf.mxu0
    %v147 = vadd.f32 0.0, %v146
    %v148 = vpop.f32.mrf.mxu0
    %149 = vdwg.mxu0
    %v150 = vpack.c.bf16 %v95, %v95
    %151 = vst [vmem:[#allocation7] sm:$0xf] %v150
    %v152 = vpack.c.bf16 %v108, %v108
    %s153 = scalar_lea.vmem [#allocation7], 4
    %154 = vst [vmem:[%s153] sm:$0xf] %v152
    %v155 = vpack.c.bf16 %v121, %v121
    %s156 = scalar_lea.vmem [#allocation7], 8
    %157 = vst [vmem:[%s156] sm:$0xf] %v155
    %v158 = vpack.c.bf16 %v134, %v134
    %s159 = scalar_lea.vmem [#allocation7], 12
    %160 = vst [vmem:[%s159] sm:$0xf] %v158
    %vm161 = vcmask 31744
    %162 = vst.msk [vmem:[%s3] sm:$0xff] %vm161, %v147
    %164 = vrot.lane.b32.xlu0 %v147, 124
    %v165 = vpop.permute.xlu0 %164
    %167 = vxpose.xlu0.b32.start [1/16] %v165, 128
    %168 = vxpose.xlu0.b32.cont [2/16] 0.0, 128
    %169 = vxpose.xlu0.b32.cont [3/16] 0.0, 128
    %170 = vxpose.xlu0.b32.cont [4/16] 0.0, 128
    %171 = vxpose.xlu0.b32.cont [5/16] 0.0, 128
    %172 = vxpose.xlu0.b32.cont [6/16] 0.0, 128
    %173 = vxpose.xlu0.b32.cont [7/16] 0.0, 128
    %174 = vxpose.xlu0.b32.cont [8/16] 0.0, 128
    %175 = vxpose.xlu0.b32.cont [9/16] 0.0, 128
    %176 = vxpose.xlu0.b32.cont [10/16] 0.0, 128
    %177 = vxpose.xlu0.b32.cont [11/16] 0.0, 128
    %178 = vxpose.xlu0.b32.cont [12/16] 0.0, 128
    %179 = vxpose.xlu0.b32.cont [13/16] 0.0, 128
    %180 = vxpose.xlu0.b32.cont [14/16] 0.0, 128
    %181 = vxpose.xlu0.b32.cont [15/16] 0.0, 128
    %182 = vxpose.xlu0.b32.end [16/16] 0.0, 128
    %v183 = vpop.trf.xlu0
    %v184 = vpop.trf.xlu0
    %v185 = vpop.trf.xlu0
    %v186 = vpop.trf.xlu0
    %v187 = vpop.trf.xlu0
    %v188 = vpop.trf.xlu0
    %v189 = vpop.trf.xlu0
    %v190 = vpop.trf.xlu0
    %v191 = vpop.trf.xlu0
    %v192 = vpop.trf.xlu0
    %v193 = vpop.trf.xlu0
    %v194 = vpop.trf.xlu0
    %v195 = vpop.trf.xlu0
    %v196 = vpop.trf.xlu0
    %v197 = vpop.trf.xlu0
    %v198 = vpop.trf.xlu0
    %vm199 = vcmask 60416
    %200 = vst.msk [vmem:[#allocation8] sm:$0xf] %vm199, %v183
    // Predicated region
    $region18: #{tpu_custom_call.1} parent=1 // pred_check
      _
    $region19: #{tpu_custom_call.1} parent=1 // pred_check_branch
      %202 = sbr.rel (0) target = $region21
    $region20: #{tpu_custom_call.1} parent=1 // pred_region
      %204 = vsyncadd [#allocation4], 0
      %s205 = sshll.u32 [#allocation7], 4
      %s206 = int_to_ptr.vmem [resolvable:$true] %s205
      %s207 = sshll.u32 %s2, 4
      %s208 = int_to_ptr.hbm [resolvable:$true] %s207
      %213 = dma.vmem_to_hbm [thread:$0]  %s206, 256, %s208, [#allocation4], 64, 64, 4
    $region21: #{tpu_custom_call.1} parent=1 // pred_fallthru
      _
    // Predicated region
    $region22: #{tpu_custom_call.1} parent=1 // pred_check
      _
    $region23: #{tpu_custom_call.1} parent=1 // pred_check_branch
      %215 = sbr.rel (0) target = $region25
    $region24: #{tpu_custom_call.1} parent=1 // pred_region
      _
    $region25: #{tpu_custom_call.1} parent=1 // pred_fallthru
      _
    // Predicated region
    $region26: #{tpu_custom_call.1} parent=1 // pred_check
      _
    $region27: #{tpu_custom_call.1} parent=1 // pred_check_branch
      %217 = sbr.rel (0) target = $region29
    $region28: #{tpu_custom_call.1} parent=1 // pred_region
      %219 = vsyncadd [#allocation9], 0
      %s221 = sshll.u32 [#allocation8], 4
      %s222 = int_to_ptr.vmem [resolvable:$true] %s221
      %s223 = sshll.u32 %s4, 4
      %s224 = int_to_ptr.hbm [resolvable:$true] %s223
      %226 = dma.vmem_to_hbm [thread:$0]  %s222, 64, %s224, [#allocation9]
    $region29: #{tpu_custom_call.1} parent=1 // pred_fallthru
      _
    // Predicated region
    $region30: #{tpu_custom_call.1} parent=1 // pred_check
      _
    $region31: #{tpu_custom_call.1} parent=1 // pred_check_branch
      %228 = sbr.rel (0) target = $region33
    $region32: #{tpu_custom_call.1} parent=1 // pred_region
      %230 = dma.done [#allocation4], 256
    $region33: #{tpu_custom_call.1} parent=1 // pred_fallthru
      _
    // Predicated region
    $region34: #{tpu_custom_call.1} parent=1 // pred_check
      _
    $region35: #{tpu_custom_call.1} parent=1 // pred_check_branch
      %232 = sbr.rel (0) target = $region37
    $region36: #{tpu_custom_call.1} parent=1 // pred_region
      _
    $region37: #{tpu_custom_call.1} parent=1 // pred_fallthru
      _
    // Predicated region
    $region38: #{tpu_custom_call.1} parent=1 // pred_check
      _
    $region39: #{tpu_custom_call.1} parent=1 // pred_check_branch
      %234 = sbr.rel (0) target = $region41
    $region40: #{tpu_custom_call.1} parent=1 // pred_region
      %236 = dma.done [#allocation9], 64
    $region41: #{tpu_custom_call.1} parent=1 // pred_fallthru
      _
    %237 = vsyncpa [#allocation3], 1
    %238 = vsyncpa [#allocation6], 1
    %239 = vsyncpa [#allocation4], 1
    %240 = vsyncpa [#allocation9], 1

</llo_original>
